<compile_context>
chip_gen: v5e
topology: v5e:2x2
jax: 0.10.0
libtpu: 0.0.40
codegen_flags: <defaults>
</compile_context>

<pallas_src>
import math

import jax
import jax.numpy as jnp
from jax.experimental import pallas as pl
from jax.experimental.pallas import tpu as pltpu

PAD = 8                                   # = max dilation (d8)
TAP_OFFSETS = (-8, -4, -2, -1, 0, 1, 2, 4, 8)
NUM_TAPS = len(TAP_OFFSETS)
BN_EPS = 1e-5


# ------------------------------- Pallas kernel -------------------------------

def _short_conv_block_kernel(bB, L, nIn, n, nOut, add_residual):
    """Whole ShortConvBlock for bB batch elements (one grid step)."""

    def kernel(x_ref, w1_ref, b1_ref, a1_ref, w2_ref, sc2_ref, sh2_ref, a2_ref,
               o_ref, pad_ref, slab_ref):
        # ---- stage 1: 1x1 conv (BN1 folded into w1/b1) + PReLU ----
        x = x_ref[...]                                             # (bB, L, nIn) f32
        xm = x.reshape(bB * L, nIn)
        h = jnp.dot(xm.astype(jnp.bfloat16), w1_ref[...],
                    preferred_element_type=jnp.float32)            # (bB*L, n)
        h = h + b1_ref[...]
        h = jnp.where(h >= 0.0, h, a1_ref[...] * h)                # PReLU (br1)
        hb = h.astype(jnp.bfloat16)

        # Write the activation into a zero-padded bf16 VMEM scratch so the
        # dilated taps see zeros at the sequence borders.  The scratch persists
        # across grid steps (and may start uninitialized on either TensorCore),
        # so re-zero the halos every step (cheap: 2*PAD rows per batch).
        zero_halo = jnp.zeros((PAD, n), jnp.bfloat16)
        for b in range(bB):
            pad_ref[b, 0:PAD, :] = zero_halo
            pad_ref[b, PAD + L:PAD + L + PAD, :] = zero_halo
            pad_ref[b, PAD:PAD + L, :] = hb[b * L:(b + 1) * L, :]

        # ---- stage 2: build the (bB*L, 9n) tap slab from shifted ref-slices
        # (vector loads, one tap live at a time), then ONE K=9n MXU matmul that
        # realizes d1/d2/d4/d8 + add cascade + channel concat in a single dot.
        for b in range(bB):
            for t, off in enumerate(TAP_OFFSETS):
                slab_ref[b * L:(b + 1) * L, t * n:(t + 1) * n] = \
                    pad_ref[b, PAD + off:PAD + off + L, :]

        acc = jnp.dot(slab_ref[...], w2_ref[...],
                      preferred_element_type=jnp.float32)          # (bB*L, nOut)

        if add_residual:                                           # nIn == nOut path
            acc = acc + xm                                         # exact f32 residual

        # BN2 folded to an affine epilogue, then PReLU (br2)
        acc = acc * sc2_ref[...] + sh2_ref[...]
        acc = jnp.where(acc >= 0.0, acc, a2_ref[...] * acc)
        o_ref[...] = acc.reshape(bB, L, nOut)

    return kernel


# --------------------------- offline weight folding ---------------------------

def _build_fused_dilated_weight(p, n, n1, nOut):
    """Encode d1/d2/d4/d8 + add1/add2/add3 + the channel concat as one
    (9, n, nOut) weight tensor indexed by tap offset."""
    W2 = jnp.zeros((NUM_TAPS, n, nOut), jnp.float32)

    def add_conv(W2, wd, dil, col_start, width):
        # wd: torch layout (width, n, 3); k=0/1/2 taps sit at offsets -d / 0 / +d
        for k, off in enumerate((-dil, 0, dil)):
            t = TAP_OFFSETS.index(off)
            W2 = W2.at[t, :, col_start:col_start + width].add(jnp.transpose(wd[:, :, k]))
        return W2

    # combine = concat([d1, d2, d2 + d4, d2 + d4 + d8], channel axis)
    W2 = add_conv(W2, p["d1_w"], 1, 0, n1)
    for cs in (n1, n1 + n, n1 + 2 * n):
        W2 = add_conv(W2, p["d2_w"], 2, cs, n)
    for cs in (n1 + n, n1 + 2 * n):
        W2 = add_conv(W2, p["d4_w"], 4, cs, n)
    W2 = add_conv(W2, p["d8_w"], 8, n1 + 2 * n, n)
    # TODO(synk): the fused weight is ~2/3 zeros; on v5e at very wide channels the
    # per-dilation 4-matmul form (K=3n each) would avoid the ~3x MAC inflation.
    return W2


# ----------------------------- tiling / VMEM helpers ---------------------------

def _pick_batch_block(B, L):
    """Batch elements per grid step: enough rows to feed the MXU M dim, but
    keep >= 2 parallel grid steps when B allows (dual-TC v7x)."""
    if L % 8 != 0:        # keep the (bB, L, C) -> (bB*L, C) reshape layout-trivial
        return 1
    target = max(1, -(-256 // L))          # ceil(256 / L) rows of M
    bB = 1
    for cand in range(1, B + 1):
        if B % cand == 0 and cand <= target:
            bB = cand
    if B >= 2 and B // bB < 2:             # guarantee >= 2 parallel steps
        for cand in range(bB - 1, 0, -1):
            if B % cand == 0 and B // cand >= 2:
                bB = cand
                break
    return bB


def _vmem_limit_bytes(bB, L, nIn, nOut, n):
    blk = 2 * bB * L * nIn * 4 + 2 * bB * L * nOut * 4            # x/out, double-buffered
    wts = 2 * (nIn * n + NUM_TAPS * n * nOut) * 2 + 2 * (2 * n + 3 * nOut) * 4
    scr = bB * (L + 2 * PAD) * n * 2 + bB * L * NUM_TAPS * n * 2
    need = blk + wts + scr
    return int(min(max(4 * need, 16 << 20), 48 << 20))            # v7x: 64 MiB physical


# ---------------------------------- wrapper -----------------------------------

def short_conv_block(params, x, add=True):
    """x: (B, L, nIn) channels-last float32. Returns (B, L, nOut) float32."""
    B, L, nIn = x.shape
    nOut = params["bn2"]["gamma"].shape[0]
    n = nOut // 4
    n1 = nOut - 3 * n
    add_residual = bool(add) and (nIn == nOut)
    bB = _pick_batch_block(B, L)

    # fold BatchNorm1 (eval) into the 1x1 conv weight columns and bias
    s1 = params["bn1"]["gamma"] / jnp.sqrt(params["bn1"]["var"] + BN_EPS)        # (n,)
    w1 = jnp.transpose(params["c1_w"][:, :, 0]) * s1[None, :]                    # (nIn, n)
    b1 = (params["c1_b"] - params["bn1"]["mean"]) * s1 + params["bn1"]["beta"]   # (n,)

    # fused 9-tap weight for the dilated branch (dilated convs have no bias),
    # flattened to (9n, nOut) to match the in-kernel tap slab
    w2 = _build_fused_dilated_weight(params, n, n1, nOut).reshape(NUM_TAPS * n, nOut)

    # BatchNorm2 (eval) folded to scale/shift, applied AFTER the optional residual
    s2 = params["bn2"]["gamma"] / jnp.sqrt(params["bn2"]["var"] + BN_EPS)        # (nOut,)
    sh2 = params["bn2"]["beta"] - params["bn2"]["mean"] * s2                     # (nOut,)

    flops = 2 * B * L * (nIn * n + NUM_TAPS * n * nOut)
    bytes_accessed = (B * L * nIn * 4 + B * L * nOut * 4
                      + nIn * n * 2 + NUM_TAPS * n * nOut * 2
                      + (2 * n + 3 * nOut) * 4)

    kernel = _short_conv_block_kernel(bB, L, nIn, n, nOut, add_residual)
    return pl.pallas_call(
        kernel,
        out_shape=jax.ShapeDtypeStruct((B, L, nOut), jnp.float32),
        grid=(B // bB,),
        in_specs=[
            pl.BlockSpec((bB, L, nIn), lambda i: (i, 0, 0)),                 # x (f32, per block)
            pl.BlockSpec((nIn, n), lambda i: (0, 0)),                        # folded 1x1 weight
            pl.BlockSpec((1, n), lambda i: (0, 0)),                          # folded 1x1 bias
            pl.BlockSpec((1, n), lambda i: (0, 0)),                          # PReLU1 slope
            pl.BlockSpec((NUM_TAPS * n, nOut), lambda i: (0, 0)),            # fused dilated weight
            pl.BlockSpec((1, nOut), lambda i: (0, 0)),                       # BN2 scale
            pl.BlockSpec((1, nOut), lambda i: (0, 0)),                       # BN2 shift
            pl.BlockSpec((1, nOut), lambda i: (0, 0)),                       # PReLU2 slope
        ],
        out_specs=pl.BlockSpec((bB, L, nOut), lambda i: (i, 0, 0)),
        scratch_shapes=[
            pltpu.VMEM((bB, L + 2 * PAD, n), jnp.bfloat16),                  # zero-padded act
            pltpu.VMEM((bB * L, NUM_TAPS * n), jnp.bfloat16),                # 9-tap slab
        ],
        compiler_params=pltpu.CompilerParams(
            dimension_semantics=("parallel",),
            vmem_limit_bytes=_vmem_limit_bytes(bB, L, nIn, nOut, n)),
        cost_estimate=pl.CostEstimate(flops=flops, transcendentals=0,
                                      bytes_accessed=bytes_accessed),
    )(
        x,                                          # f32, no wrapper-side cast
        w1.astype(jnp.bfloat16),
        b1.reshape(1, n),
        params["a1"].reshape(1, n),
        w2.astype(jnp.bfloat16),
        s2.reshape(1, nOut),
        sh2.reshape(1, nOut),
        params["a2"].reshape(1, nOut),
    )


# ----------------------------- pure-JAX reference -----------------------------

def _conv1d_ref(x, w, b=None, padding=0, dilation=1):
    """x: (B, L, Cin) channels-last; w: (Cout, Cin, K) torch layout."""
    B, L, Cin = x.shape
    Cout, _, K = w.shape
    Lout = L + 2 * padding - dilation * (K - 1)
    xp = jnp.pad(x, ((0, 0), (padding, padding), (0, 0)))
    cols = [xp[:, k * dilation:k * dilation + Lout, :] for k in range(K)]
    xcol = jnp.concatenate(cols, axis=-1)
    wmat = jnp.transpose(w, (2, 1, 0)).reshape(K * Cin, Cout)
    y = jnp.einsum("blk,kn->bln", xcol, wmat,
                   preferred_element_type=jnp.float32,
                   precision=jax.lax.Precision.HIGHEST)
    return y if b is None else y + b


def _bn_eval_ref(x, bn):
    return (x - bn["mean"]) / jnp.sqrt(bn["var"] + BN_EPS) * bn["gamma"] + bn["beta"]


def _prelu_ref(x, a):
    return jnp.where(x >= 0, x, a * x)


def short_conv_block_reference(p, x, add=True):
    nIn = x.shape[-1]
    nOut = p["bn2"]["gamma"].shape[0]
    o1 = _prelu_ref(_bn_eval_ref(_conv1d_ref(x, p["c1_w"], p["c1_b"]), p["bn1"]), p["a1"])
    d1 = _conv1d_ref(o1, p["d1_w"], padding=1, dilation=1)
    d2 = _conv1d_ref(o1, p["d2_w"], padding=2, dilation=2)
    d4 = _conv1d_ref(o1, p["d4_w"], padding=4, dilation=4)
    d8 = _conv1d_ref(o1, p["d8_w"], padding=8, dilation=8)
    add1 = d2
    add2 = add1 + d4
    add3 = add2 + d8
    comb = jnp.concatenate([d1, add1, add2, add3], axis=-1)
    if add and nIn == nOut:
        comb = x + comb
    return _prelu_ref(_bn_eval_ref(comb, p["bn2"]), p["a2"])


# ------------------------------- parameter init --------------------------------

class KeyGen:
    def __init__(self, seed=0):
        self._key = jax.random.PRNGKey(seed)

    def __call__(self):
        self._key, sub = jax.random.split(self._key)
        return sub


def _uniform(key, shape, bound):
    return jax.random.uniform(key, shape, jnp.float32, -bound, bound)


def _init_conv(kg, cout, cin, k, bias=True):
    bound = 1.0 / math.sqrt(cin * k)
    w = _uniform(kg(), (cout, cin, k), bound)
    b = _uniform(kg(), (cout,), bound) if bias else None
    return w, b


def _init_bn(kg, c):
    # mildly perturbed running stats / affine so the BN folding is actually exercised
    return {"gamma": 1.0 + 0.1 * jax.random.normal(kg(), (c,), jnp.float32),
            "beta": 0.1 * jax.random.normal(kg(), (c,), jnp.float32),
            "mean": 0.1 * jax.random.normal(kg(), (c,), jnp.float32),
            "var": 1.0 + 0.2 * jax.random.uniform(kg(), (c,), jnp.float32)}


def init_short_conv_block(kg, nIn, nOut):
    n = nOut // 4
    n1 = nOut - 3 * n
    p = {}
    p["c1_w"], p["c1_b"] = _init_conv(kg, n, nIn, 1)
    p["bn1"] = _init_bn(kg, n)
    p["a1"] = jnp.full((n,), 0.25, jnp.float32)       # nn.PReLU() default slope
    p["d1_w"], _ = _init_conv(kg, n1, n, 3, bias=False)
    p["d2_w"], _ = _init_conv(kg, n, n, 3, bias=False)
    p["d4_w"], _ = _init_conv(kg, n, n, 3, bias=False)
    p["d8_w"], _ = _init_conv(kg, n, n, 3, bias=False)
    p["bn2"] = _init_bn(kg, nOut)
    p["a2"] = jnp.full((nOut,), 0.25, jnp.float32)
    return p


# ------------------------------------ main -------------------------------------

if __name__ == "__main__":
    kg = KeyGen(0)
    B, L = 2, 16

    fwd = jax.jit(short_conv_block)

    # config 1: nIn == nOut -> residual-add path is active (add=True)
    nIn, nOut = 64, 64
    params = init_short_conv_block(kg, nIn, nOut)
    x = jax.random.normal(kg(), (B, L, nIn), jnp.float32)
    out = fwd(params, x)
    jax.block_until_ready(out)
    assert out.shape == (B, L, nOut) and out.dtype == jnp.float32, out.shape
    ref = short_conv_block_reference(params, x)
    err = float(jnp.max(jnp.abs(out - ref)))
    assert err < 5e-2, f"residual-path mismatch: max abs err = {err}"

    # config 2: nIn != nOut -> residual disabled by the module
    nIn2, nOut2 = 64, 32
    params2 = init_short_conv_block(kg, nIn2, nOut2)
    x2 = jax.random.normal(kg(), (B, L, nIn2), jnp.float32)
    out2 = fwd(params2, x2)
    jax.block_until_ready(out2)
    assert out2.shape == (B, L, nOut2), out2.shape
    ref2 = short_conv_block_reference(params2, x2)
    err2 = float(jnp.max(jnp.abs(out2 - ref2)))
    assert err2 < 5e-2, f"no-residual-path mismatch: max abs err = {err2}"

    print("KERNEL_OK")
</pallas_src>

<mosaic_0001>
module attributes {stable_mosaic.version = 11 : i64} {
  func.func @kernel(%arg0: i32, %arg1: memref<1x16x64xf32, #tpu.memory_space<vmem>>, %arg2: memref<64x16xbf16, #tpu.memory_space<vmem>>, %arg3: memref<1x16xf32, #tpu.memory_space<vmem>>, %arg4: memref<1x16xf32, #tpu.memory_space<vmem>>, %arg5: memref<144x64xbf16, #tpu.memory_space<vmem>>, %arg6: memref<1x64xf32, #tpu.memory_space<vmem>>, %arg7: memref<1x64xf32, #tpu.memory_space<vmem>>, %arg8: memref<1x64xf32, #tpu.memory_space<vmem>>, %arg9: memref<1x16x64xf32, #tpu.memory_space<vmem>>, %arg10: memref<1x32x16xbf16, #tpu.memory_space<vmem>>, %arg11: memref<16x144xbf16, #tpu.memory_space<vmem>>) attributes {dimension_semantics = [#tpu.dimension_semantics<parallel>], iteration_bounds = array<i64: 2>, scalar_prefetch = 0 : i64, scratch_operands = 2 : i64, tpu.core_type = #tpu.core_type<tc>, window_params = [{transform_indices = @transform_0, window_bounds = array<i64: 1, 16, 64>}, {pipeline_mode = #tpu.pipeline_mode<synchronous>, transform_indices = @transform_1, window_bounds = array<i64: 64, 16>}, {pipeline_mode = #tpu.pipeline_mode<synchronous>, transform_indices = @transform_2, window_bounds = array<i64: 1, 16>}, {pipeline_mode = #tpu.pipeline_mode<synchronous>, transform_indices = @transform_3, window_bounds = array<i64: 1, 16>}, {pipeline_mode = #tpu.pipeline_mode<synchronous>, transform_indices = @transform_4, window_bounds = array<i64: 144, 64>}, {pipeline_mode = #tpu.pipeline_mode<synchronous>, transform_indices = @transform_5, window_bounds = array<i64: 1, 64>}, {pipeline_mode = #tpu.pipeline_mode<synchronous>, transform_indices = @transform_6, window_bounds = array<i64: 1, 64>}, {pipeline_mode = #tpu.pipeline_mode<synchronous>, transform_indices = @transform_7, window_bounds = array<i64: 1, 64>}, {transform_indices = @transform_8, window_bounds = array<i64: 1, 16, 64>}]} {
    %c0 = arith.constant 0 : index
    %c0_0 = arith.constant 0 : index
    %c0_1 = arith.constant 0 : index
    %0 = vector.load %arg1[%c0, %c0_0, %c0_1] : memref<1x16x64xf32, #tpu.memory_space<vmem>>, vector<1x16x64xf32>
    %1 = vector.shape_cast %0 : vector<1x16x64xf32> to vector<16x64xf32>
    %2 = arith.truncf %1 : vector<16x64xf32> to vector<16x64xbf16>
    %c0_2 = arith.constant 0 : index
    %c0_3 = arith.constant 0 : index
    %3 = vector.load %arg2[%c0_2, %c0_3] : memref<64x16xbf16, #tpu.memory_space<vmem>>, vector<64x16xbf16>
    %cst = arith.constant dense<0.000000e+00> : vector<16x16xf32>
    %4 = tpu.matmul %2, %3, %cst {dimension_numbers = #tpu.dot_dimension_numbers<[1], [0], [0], [1], [0, 0, 1, 1], [], []>} : vector<16x64xbf16>, vector<64x16xbf16>, vector<16x16xf32> -> vector<16x16xf32>
    %c0_4 = arith.constant 0 : index
    %c0_5 = arith.constant 0 : index
    %5 = vector.load %arg3[%c0_4, %c0_5] : memref<1x16xf32, #tpu.memory_space<vmem>>, vector<1x16xf32>
    %6 = vector.broadcast %5 : vector<1x16xf32> to vector<16x16xf32>
    %7 = arith.addf %4, %6 : vector<16x16xf32>
    %cst_6 = arith.constant 0.000000e+00 : f32
    %8 = vector.broadcast %cst_6 : f32 to vector<16x16xf32>
    %9 = arith.cmpf oge, %7, %8 : vector<16x16xf32>
    %c0_7 = arith.constant 0 : index
    %c0_8 = arith.constant 0 : index
    %10 = vector.load %arg4[%c0_7, %c0_8] : memref<1x16xf32, #tpu.memory_space<vmem>>, vector<1x16xf32>
    %11 = vector.broadcast %10 : vector<1x16xf32> to vector<16x16xf32>
    %12 = arith.mulf %11, %7 : vector<16x16xf32>
    %13 = arith.select %9, %7, %12 : vector<16x16xi1>, vector<16x16xf32>
    %14 = arith.truncf %13 : vector<16x16xf32> to vector<16x16xbf16>
    %cst_9 = arith.constant 0.000000e+00 : bf16
    %15 = vector.broadcast %cst_9 : bf16 to vector<8x16xbf16>
    %c0_10 = arith.constant 0 : index
    %c0_11 = arith.constant 0 : index
    %c0_12 = arith.constant 0 : index
    %16 = vector.load %arg10[%c0_10, %c0_11, %c0_12] : memref<1x32x16xbf16, #tpu.memory_space<vmem>>, vector<1x8x16xbf16>
    %17 = vector.shape_cast %16 : vector<1x8x16xbf16> to vector<8x16xbf16>
    %18 = vector.shape_cast %15 : vector<8x16xbf16> to vector<1x8x16xbf16>
    tpu.vector_store %arg10[%c0_10, %c0_11, %c0_12], %18 {strides = array<i32>} : memref<1x32x16xbf16, #tpu.memory_space<vmem>>, vector<1x8x16xbf16>,
    %c0_13 = arith.constant 0 : index
    %c24 = arith.constant 24 : index
    %c0_14 = arith.constant 0 : index
    %19 = vector.load %arg10[%c0_13, %c24, %c0_14] : memref<1x32x16xbf16, #tpu.memory_space<vmem>>, vector<1x8x16xbf16>
    %20 = vector.shape_cast %19 : vector<1x8x16xbf16> to vector<8x16xbf16>
    %21 = vector.shape_cast %15 : vector<8x16xbf16> to vector<1x8x16xbf16>
    tpu.vector_store %arg10[%c0_13, %c24, %c0_14], %21 {strides = array<i32>} : memref<1x32x16xbf16, #tpu.memory_space<vmem>>, vector<1x8x16xbf16>,
    %c0_15 = arith.constant 0 : index
    %c8 = arith.constant 8 : index
    %c0_16 = arith.constant 0 : index
    %22 = vector.load %arg10[%c0_15, %c8, %c0_16] : memref<1x32x16xbf16, #tpu.memory_space<vmem>>, vector<1x16x16xbf16>
    %23 = vector.shape_cast %22 : vector<1x16x16xbf16> to vector<16x16xbf16>
    %24 = vector.shape_cast %14 : vector<16x16xbf16> to vector<1x16x16xbf16>
    tpu.vector_store %arg10[%c0_15, %c8, %c0_16], %24 {strides = array<i32>} : memref<1x32x16xbf16, #tpu.memory_space<vmem>>, vector<1x16x16xbf16>,
    %c0_17 = arith.constant 0 : index
    %c0_18 = arith.constant 0 : index
    %c0_19 = arith.constant 0 : index
    %25 = vector.load %arg10[%c0_17, %c0_18, %c0_19] : memref<1x32x16xbf16, #tpu.memory_space<vmem>>, vector<1x16x16xbf16>
    %26 = vector.shape_cast %25 : vector<1x16x16xbf16> to vector<16x16xbf16>
    %c0_20 = arith.constant 0 : index
    %c0_21 = arith.constant 0 : index
    %27 = vector.load %arg11[%c0_20, %c0_21] : memref<16x144xbf16, #tpu.memory_space<vmem>>, vector<16x16xbf16>
    tpu.vector_store %arg11[%c0_20, %c0_21], %26 {strides = array<i32>} : memref<16x144xbf16, #tpu.memory_space<vmem>>, vector<16x16xbf16>,
    %c0_22 = arith.constant 0 : index
    %c4 = arith.constant 4 : index
    %c0_23 = arith.constant 0 : index
    %28 = vector.load %arg10[%c0_22, %c4, %c0_23] : memref<1x32x16xbf16, #tpu.memory_space<vmem>>, vector<1x16x16xbf16>
    %29 = vector.shape_cast %28 : vector<1x16x16xbf16> to vector<16x16xbf16>
    %c0_24 = arith.constant 0 : index
    %c16 = arith.constant 16 : index
    %30 = vector.load %arg11[%c0_24, %c16] : memref<16x144xbf16, #tpu.memory_space<vmem>>, vector<16x16xbf16>
    tpu.vector_store %arg11[%c0_24, %c16], %29 {strides = array<i32>} : memref<16x144xbf16, #tpu.memory_space<vmem>>, vector<16x16xbf16>,
    %c0_25 = arith.constant 0 : index
    %c6 = arith.constant 6 : index
    %c0_26 = arith.constant 0 : index
    %31 = vector.load %arg10[%c0_25, %c6, %c0_26] : memref<1x32x16xbf16, #tpu.memory_space<vmem>>, vector<1x16x16xbf16>
    %32 = vector.shape_cast %31 : vector<1x16x16xbf16> to vector<16x16xbf16>
    %c0_27 = arith.constant 0 : index
    %c32 = arith.constant 32 : index
    %33 = vector.load %arg11[%c0_27, %c32] : memref<16x144xbf16, #tpu.memory_space<vmem>>, vector<16x16xbf16>
    tpu.vector_store %arg11[%c0_27, %c32], %32 {strides = array<i32>} : memref<16x144xbf16, #tpu.memory_space<vmem>>, vector<16x16xbf16>,
    %c0_28 = arith.constant 0 : index
    %c7 = arith.constant 7 : index
    %c0_29 = arith.constant 0 : index
    %34 = vector.load %arg10[%c0_28, %c7, %c0_29] : memref<1x32x16xbf16, #tpu.memory_space<vmem>>, vector<1x16x16xbf16>
    %35 = vector.shape_cast %34 : vector<1x16x16xbf16> to vector<16x16xbf16>
    %c0_30 = arith.constant 0 : index
    %c48 = arith.constant 48 : index
    %36 = vector.load %arg11[%c0_30, %c48] : memref<16x144xbf16, #tpu.memory_space<vmem>>, vector<16x16xbf16>
    tpu.vector_store %arg11[%c0_30, %c48], %35 {strides = array<i32>} : memref<16x144xbf16, #tpu.memory_space<vmem>>, vector<16x16xbf16>,
    %c0_31 = arith.constant 0 : index
    %c8_32 = arith.constant 8 : index
    %c0_33 = arith.constant 0 : index
    %37 = vector.load %arg10[%c0_31, %c8_32, %c0_33] : memref<1x32x16xbf16, #tpu.memory_space<vmem>>, vector<1x16x16xbf16>
    %38 = vector.shape_cast %37 : vector<1x16x16xbf16> to vector<16x16xbf16>
    %c0_34 = arith.constant 0 : index
    %c64 = arith.constant 64 : index
    %39 = vector.load %arg11[%c0_34, %c64] : memref<16x144xbf16, #tpu.memory_space<vmem>>, vector<16x16xbf16>
    tpu.vector_store %arg11[%c0_34, %c64], %38 {strides = array<i32>} : memref<16x144xbf16, #tpu.memory_space<vmem>>, vector<16x16xbf16>,
    %c0_35 = arith.constant 0 : index
    %c9 = arith.constant 9 : index
    %c0_36 = arith.constant 0 : index
    %40 = vector.load %arg10[%c0_35, %c9, %c0_36] : memref<1x32x16xbf16, #tpu.memory_space<vmem>>, vector<1x16x16xbf16>
    %41 = vector.shape_cast %40 : vector<1x16x16xbf16> to vector<16x16xbf16>
    %c0_37 = arith.constant 0 : index
    %c80 = arith.constant 80 : index
    %42 = vector.load %arg11[%c0_37, %c80] : memref<16x144xbf16, #tpu.memory_space<vmem>>, vector<16x16xbf16>
    tpu.vector_store %arg11[%c0_37, %c80], %41 {strides = array<i32>} : memref<16x144xbf16, #tpu.memory_space<vmem>>, vector<16x16xbf16>,
    %c0_38 = arith.constant 0 : index
    %c10 = arith.constant 10 : index
    %c0_39 = arith.constant 0 : index
    %43 = vector.load %arg10[%c0_38, %c10, %c0_39] : memref<1x32x16xbf16, #tpu.memory_space<vmem>>, vector<1x16x16xbf16>
    %44 = vector.shape_cast %43 : vector<1x16x16xbf16> to vector<16x16xbf16>
    %c0_40 = arith.constant 0 : index
    %c96 = arith.constant 96 : index
    %45 = vector.load %arg11[%c0_40, %c96] : memref<16x144xbf16, #tpu.memory_space<vmem>>, vector<16x16xbf16>
    tpu.vector_store %arg11[%c0_40, %c96], %44 {strides = array<i32>} : memref<16x144xbf16, #tpu.memory_space<vmem>>, vector<16x16xbf16>,
    %c0_41 = arith.constant 0 : index
    %c12 = arith.constant 12 : index
    %c0_42 = arith.constant 0 : index
    %46 = vector.load %arg10[%c0_41, %c12, %c0_42] : memref<1x32x16xbf16, #tpu.memory_space<vmem>>, vector<1x16x16xbf16>
    %47 = vector.shape_cast %46 : vector<1x16x16xbf16> to vector<16x16xbf16>
    %c0_43 = arith.constant 0 : index
    %c112 = arith.constant 112 : index
    %48 = vector.load %arg11[%c0_43, %c112] : memref<16x144xbf16, #tpu.memory_space<vmem>>, vector<16x16xbf16>
    tpu.vector_store %arg11[%c0_43, %c112], %47 {strides = array<i32>} : memref<16x144xbf16, #tpu.memory_space<vmem>>, vector<16x16xbf16>,
    %c0_44 = arith.constant 0 : index
    %c16_45 = arith.constant 16 : index
    %c0_46 = arith.constant 0 : index
    %49 = vector.load %arg10[%c0_44, %c16_45, %c0_46] : memref<1x32x16xbf16, #tpu.memory_space<vmem>>, vector<1x16x16xbf16>
    %50 = vector.shape_cast %49 : vector<1x16x16xbf16> to vector<16x16xbf16>
    %c0_47 = arith.constant 0 : index
    %c128 = arith.constant 128 : index
    %51 = vector.load %arg11[%c0_47, %c128] : memref<16x144xbf16, #tpu.memory_space<vmem>>, vector<16x16xbf16>
    tpu.vector_store %arg11[%c0_47, %c128], %50 {strides = array<i32>} : memref<16x144xbf16, #tpu.memory_space<vmem>>, vector<16x16xbf16>,
    %c0_48 = arith.constant 0 : index
    %c0_49 = arith.constant 0 : index
    %52 = vector.load %arg11[%c0_48, %c0_49] : memref<16x144xbf16, #tpu.memory_space<vmem>>, vector<16x144xbf16>
    %c0_50 = arith.constant 0 : index
    %c0_51 = arith.constant 0 : index
    %53 = vector.load %arg5[%c0_50, %c0_51] : memref<144x64xbf16, #tpu.memory_space<vmem>>, vector<144x64xbf16>
    %cst_52 = arith.constant dense<0.000000e+00> : vector<16x64xf32>
    %54 = tpu.matmul %52, %53, %cst_52 {dimension_numbers = #tpu.dot_dimension_numbers<[1], [0], [0], [1], [0, 0, 1, 1], [], []>} : vector<16x144xbf16>, vector<144x64xbf16>, vector<16x64xf32> -> vector<16x64xf32>
    %55 = arith.addf %54, %1 : vector<16x64xf32>
    %c0_53 = arith.constant 0 : index
    %c0_54 = arith.constant 0 : index
    %56 = vector.load %arg6[%c0_53, %c0_54] : memref<1x64xf32, #tpu.memory_space<vmem>>, vector<1x64xf32>
    %57 = vector.broadcast %56 : vector<1x64xf32> to vector<16x64xf32>
    %58 = arith.mulf %55, %57 : vector<16x64xf32>
    %c0_55 = arith.constant 0 : index
    %c0_56 = arith.constant 0 : index
    %59 = vector.load %arg7[%c0_55, %c0_56] : memref<1x64xf32, #tpu.memory_space<vmem>>, vector<1x64xf32>
    %60 = vector.broadcast %59 : vector<1x64xf32> to vector<16x64xf32>
    %61 = arith.addf %58, %60 : vector<16x64xf32>
    %cst_57 = arith.constant 0.000000e+00 : f32
    %62 = vector.broadcast %cst_57 : f32 to vector<16x64xf32>
    %63 = arith.cmpf oge, %61, %62 : vector<16x64xf32>
    %c0_58 = arith.constant 0 : index
    %c0_59 = arith.constant 0 : index
    %64 = vector.load %arg8[%c0_58, %c0_59] : memref<1x64xf32, #tpu.memory_space<vmem>>, vector<1x64xf32>
    %65 = vector.broadcast %64 : vector<1x64xf32> to vector<16x64xf32>
    %66 = arith.mulf %65, %61 : vector<16x64xf32>
    %67 = arith.select %63, %61, %66 : vector<16x64xi1>, vector<16x64xf32>
    %68 = vector.shape_cast %67 : vector<16x64xf32> to vector<1x16x64xf32>
    %c0_60 = arith.constant 0 : index
    %c0_61 = arith.constant 0 : index
    %c0_62 = arith.constant 0 : index
    %69 = vector.load %arg9[%c0_60, %c0_61, %c0_62] : memref<1x16x64xf32, #tpu.memory_space<vmem>>, vector<1x16x64xf32>
    tpu.vector_store %arg9[%c0_60, %c0_61, %c0_62], %68 {strides = array<i32>} : memref<1x16x64xf32, #tpu.memory_space<vmem>>, vector<1x16x64xf32>,
    return
  }
  func.func @transform_0(%arg0: i32) -> (i32, i32, i32) {
    %c0_i32 = arith.constant 0 : i32
    %c0_i32_0 = arith.constant 0 : i32
    %c0_i32_1 = arith.constant 0 : i32
    return %arg0, %c0_i32, %c0_i32_0 : i32, i32, i32
  }
  func.func @transform_1(%arg0: i32) -> (i32, i32) {
    %c0_i32 = arith.constant 0 : i32
    %c0_i32_0 = arith.constant 0 : i32
    %c0_i32_1 = arith.constant 0 : i32
    return %c0_i32, %c0_i32_0 : i32, i32
  }
  func.func @transform_2(%arg0: i32) -> (i32, i32) {
    %c0_i32 = arith.constant 0 : i32
    %c0_i32_0 = arith.constant 0 : i32
    %c0_i32_1 = arith.constant 0 : i32
    return %c0_i32, %c0_i32_0 : i32, i32
  }
  func.func @transform_3(%arg0: i32) -> (i32, i32) {
    %c0_i32 = arith.constant 0 : i32
    %c0_i32_0 = arith.constant 0 : i32
    %c0_i32_1 = arith.constant 0 : i32
    return %c0_i32, %c0_i32_0 : i32, i32
  }
  func.func @transform_4(%arg0: i32) -> (i32, i32) {
    %c0_i32 = arith.constant 0 : i32
    %c0_i32_0 = arith.constant 0 : i32
    %c0_i32_1 = arith.constant 0 : i32
    return %c0_i32, %c0_i32_0 : i32, i32
  }
  func.func @transform_5(%arg0: i32) -> (i32, i32) {
    %c0_i32 = arith.constant 0 : i32
    %c0_i32_0 = arith.constant 0 : i32
    %c0_i32_1 = arith.constant 0 : i32
    return %c0_i32, %c0_i32_0 : i32, i32
  }
  func.func @transform_6(%arg0: i32) -> (i32, i32) {
    %c0_i32 = arith.constant 0 : i32
    %c0_i32_0 = arith.constant 0 : i32
    %c0_i32_1 = arith.constant 0 : i32
    return %c0_i32, %c0_i32_0 : i32, i32
  }
  func.func @transform_7(%arg0: i32) -> (i32, i32) {
    %c0_i32 = arith.constant 0 : i32
    %c0_i32_0 = arith.constant 0 : i32
    %c0_i32_1 = arith.constant 0 : i32
    return %c0_i32, %c0_i32_0 : i32, i32
  }
  func.func @transform_8(%arg0: i32) -> (i32, i32, i32) {
    %c0_i32 = arith.constant 0 : i32
    %c0_i32_0 = arith.constant 0 : i32
    %c0_i32_1 = arith.constant 0 : i32
    return %arg0, %c0_i32, %c0_i32_0 : i32, i32, i32
  }
}

</mosaic_0001>

<llo_original>
// kernel: short_conv_block.1
$region0: #{short_conv_block.1}
  #allocation0 [shape = 'u32[]', space=smem, size = 0x4, offset = 0x4, fixed_abs, tag = 'smem constant byte address 0x4 - core index']
  #allocation1 [shape = 'u32[72,128]{1,0:T(1,128)}', space=vmem, size = 0x9000, scoped, tag = 'internal scratch']
  #allocation2 [shape = 'bf16[1,32,16]{2,1,0:T(8,128)(2,1)}', space=vmem, size = 0x2000, scoped, tag = 'scratch operand']
  #allocation3 [shape = 'bf16[16,144]{1,0:T(8,128)(2,1)}', space=vmem, size = 0x2000, scoped, tag = 'scratch operand']
  %s0 = inlined_call_operand.vmem [shape: f32[2,16,64], index: 0, kind: input, shape index: {}]
  %s1 = inlined_call_operand.vmem [shape: bf16[64,16], index: 1, kind: input, shape index: {}]
  %s2 = inlined_call_operand.vmem [shape: f32[1,16], index: 2, kind: input, shape index: {}]
  %s3 = inlined_call_operand.vmem [shape: f32[1,16], index: 3, kind: input, shape index: {}]
  %s4 = inlined_call_operand.vmem [shape: bf16[144,64], index: 4, kind: input, shape index: {}]
  %s5 = inlined_call_operand.vmem [shape: f32[1,64], index: 5, kind: input, shape index: {}]
  %s6 = inlined_call_operand.vmem [shape: f32[1,64], index: 6, kind: input, shape index: {}]
  %s7 = inlined_call_operand.vmem [shape: f32[1,64], index: 7, kind: input, shape index: {}]
  %s8 = inlined_call_operand.hbm [shape: f32[2,16,64], index: 8, kind: output, shape index: {}]
  %s9 = sld [smem:[#allocation0]]
  $region65: #{short_conv_block.1} parent=0
    _
  %s11 = ssub.s32 1, %s9
  %s12 = scalar_select 0, %s11, %s9
  $region1: #{short_conv_block.1} parent=0
    #allocation4 [shape = 'u8[16384]{0}', space=vmem, size = 0x4000, scoped, tag = 'output window, operand 0']
    #allocation5 [shape = 's32[2]{0}', space=sflag, size = 0x8, scoped, tag = 'scoped memory for short_conv_block.1']
    %13 = vsyncpa [#allocation5], 0
    %s14 = scalar_lea.sflag [#allocation5], 1
    %15 = vsyncpa %s14, 0
    loop: start=0, step=1, limit=4
    $region2: #{short_conv_block.1} parent=1 // loop_pre_header
      _
    $region3: #{short_conv_block.1} parent=1 // loop_header
      %s17 = sphi 0, %s21
      %p18 = scmp.ge.s32.totalorder %s17, 4
      %s27 = sphi 0, %s29
      %s30 = sphi 0, %s27
      %s31 = sphi 0, %s30
      %s47 = sphi 0, %s31
      %s51 = sphi 0, %s51
      %s53 = sphi 0, %s51
      %s54 = sphi 0, %s53
      %s68 = sphi 0, %s54
      %s72 = sphi 0, %s72
      %s74 = sphi 0, %s72
      %s75 = sphi 0, %s74
      %s89 = sphi 0, %s75
      %s93 = sphi 0, %s93
      %s95 = sphi 0, %s93
      %s96 = sphi 0, %s95
      %s110 = sphi 0, %s96
      %s114 = sphi 0, %s114
      %s116 = sphi 0, %s114
      %s117 = sphi 0, %s116
      %s131 = sphi 0, %s117
      %s135 = sphi 0, %s135
      %s137 = sphi 0, %s135
      %s138 = sphi 0, %s137
      %s152 = sphi 0, %s138
      %s156 = sphi 0, %s156
      %s158 = sphi 0, %s156
      %s159 = sphi 0, %s158
      %s173 = sphi 0, %s159
      %s177 = sphi 0, %s177
      %s179 = sphi 0, %s177
      %s180 = sphi 0, %s179
      %s194 = sphi 0, %s180
      %s200 = sphi 0, %s202
      %s203 = sphi 0, %s200
      %s204 = sphi 0, %s203
      %s220 = sphi 0, %s204
    $region4: #{short_conv_block.1} parent=1 // loop_header_branch
      %20 = sbr.rel (%p18) target = $region8
    $region5: #{short_conv_block.1} parent=1 // loop_body
      %s22 = ssub.s32 %s17, 1
      %s23 = ssub.s32 %s17, 2
      %s24 = sadd.s32 %s17, 1
      %s25 = ssub.s32 %s17, %s24
      %p26 = scmp.eq.s32.totalorder %s25, 0
      %s28 = sadd.s32 %s27, 1
      %s29 = scalar_select %p26, %s27, %s28
      %p32 = pneg %p26
      %p33 = scmp.eq.s32.totalorder %s17, 1
      %p34 = por %p32, %p33
      %p35 = scmp.ne.s32.totalorder %s27, %s30
      %p36 = scmp.eq.s32.totalorder %s17, 0
      %p37 = por %p35, %p36
      %p38 = scmp.ne.s32.totalorder %s27, %s30
      %p39 = scmp.eq.s32.totalorder %s22, 1
      %p40 = por %p38, %p39
      %p41 = scmp.ne.s32.totalorder %s30, %s31
      %p42 = scmp.eq.s32.totalorder %s22, 0
      %p43 = por %p41, %p42
      %p44 = scmp.ne.s32.totalorder %s30, %s31
      %p45 = scmp.eq.s32.totalorder %s23, 1
      %p46 = por %p44, %p45
      %p48 = scmp.ne.s32.totalorder %s31, %s47
      %p49 = scmp.eq.s32.totalorder %s23, 0
      %p50 = por %p48, %p49
      %s52 = sadd.s32 %s51, 1
      %p55 = scmp.eq.s32.totalorder %s17, 1
      %p56 = scmp.ne.s32.totalorder %s51, %s53
      %p57 = scmp.eq.s32.totalorder %s17, 0
      %p58 = por %p56, %p57
      %p59 = scmp.ne.s32.totalorder %s51, %s53
      %p60 = scmp.eq.s32.totalorder %s22, 1
      %p61 = por %p59, %p60
      %p62 = scmp.ne.s32.totalorder %s53, %s54
      %p63 = scmp.eq.s32.totalorder %s22, 0
      %p64 = por %p62, %p63
      %p65 = scmp.ne.s32.totalorder %s53, %s54
      %p66 = scmp.eq.s32.totalorder %s23, 1
      %p67 = por %p65, %p66
      %p69 = scmp.ne.s32.totalorder %s54, %s68
      %p70 = scmp.eq.s32.totalorder %s23, 0
      %p71 = por %p69, %p70
      %s73 = sadd.s32 %s72, 1
      %p76 = scmp.eq.s32.totalorder %s17, 1
      %p77 = scmp.ne.s32.totalorder %s72, %s74
      %p78 = scmp.eq.s32.totalorder %s17, 0
      %p79 = por %p77, %p78
      %p80 = scmp.ne.s32.totalorder %s72, %s74
      %p81 = scmp.eq.s32.totalorder %s22, 1
      %p82 = por %p80, %p81
      %p83 = scmp.ne.s32.totalorder %s74, %s75
      %p84 = scmp.eq.s32.totalorder %s22, 0
      %p85 = por %p83, %p84
      %p86 = scmp.ne.s32.totalorder %s74, %s75
      %p87 = scmp.eq.s32.totalorder %s23, 1
      %p88 = por %p86, %p87
      %p90 = scmp.ne.s32.totalorder %s75, %s89
      %p91 = scmp.eq.s32.totalorder %s23, 0
      %p92 = por %p90, %p91
      %s94 = sadd.s32 %s93, 1
      %p97 = scmp.eq.s32.totalorder %s17, 1
      %p98 = scmp.ne.s32.totalorder %s93, %s95
      %p99 = scmp.eq.s32.totalorder %s17, 0
      %p100 = por %p98, %p99
      %p101 = scmp.ne.s32.totalorder %s93, %s95
      %p102 = scmp.eq.s32.totalorder %s22, 1
      %p103 = por %p101, %p102
      %p104 = scmp.ne.s32.totalorder %s95, %s96
      %p105 = scmp.eq.s32.totalorder %s22, 0
      %p106 = por %p104, %p105
      %p107 = scmp.ne.s32.totalorder %s95, %s96
      %p108 = scmp.eq.s32.totalorder %s23, 1
      %p109 = por %p107, %p108
      %p111 = scmp.ne.s32.totalorder %s96, %s110
      %p112 = scmp.eq.s32.totalorder %s23, 0
      %p113 = por %p111, %p112
      %s115 = sadd.s32 %s114, 1
      %p118 = scmp.eq.s32.totalorder %s17, 1
      %p119 = scmp.ne.s32.totalorder %s114, %s116
      %p120 = scmp.eq.s32.totalorder %s17, 0
      %p121 = por %p119, %p120
      %p122 = scmp.ne.s32.totalorder %s114, %s116
      %p123 = scmp.eq.s32.totalorder %s22, 1
      %p124 = por %p122, %p123
      %p125 = scmp.ne.s32.totalorder %s116, %s117
      %p126 = scmp.eq.s32.totalorder %s22, 0
      %p127 = por %p125, %p126
      %p128 = scmp.ne.s32.totalorder %s116, %s117
      %p129 = scmp.eq.s32.totalorder %s23, 1
      %p130 = por %p128, %p129
      %p132 = scmp.ne.s32.totalorder %s117, %s131
      %p133 = scmp.eq.s32.totalorder %s23, 0
      %p134 = por %p132, %p133
      %s136 = sadd.s32 %s135, 1
      %p139 = scmp.eq.s32.totalorder %s17, 1
      %p140 = scmp.ne.s32.totalorder %s135, %s137
      %p141 = scmp.eq.s32.totalorder %s17, 0
      %p142 = por %p140, %p141
      %p143 = scmp.ne.s32.totalorder %s135, %s137
      %p144 = scmp.eq.s32.totalorder %s22, 1
      %p145 = por %p143, %p144
      %p146 = scmp.ne.s32.totalorder %s137, %s138
      %p147 = scmp.eq.s32.totalorder %s22, 0
      %p148 = por %p146, %p147
      %p149 = scmp.ne.s32.totalorder %s137, %s138
      %p150 = scmp.eq.s32.totalorder %s23, 1
      %p151 = por %p149, %p150
      %p153 = scmp.ne.s32.totalorder %s138, %s152
      %p154 = scmp.eq.s32.totalorder %s23, 0
      %p155 = por %p153, %p154
      %s157 = sadd.s32 %s156, 1
      %p160 = scmp.eq.s32.totalorder %s17, 1
      %p161 = scmp.ne.s32.totalorder %s156, %s158
      %p162 = scmp.eq.s32.totalorder %s17, 0
      %p163 = por %p161, %p162
      %p164 = scmp.ne.s32.totalorder %s156, %s158
      %p165 = scmp.eq.s32.totalorder %s22, 1
      %p166 = por %p164, %p165
      %p167 = scmp.ne.s32.totalorder %s158, %s159
      %p168 = scmp.eq.s32.totalorder %s22, 0
      %p169 = por %p167, %p168
      %p170 = scmp.ne.s32.totalorder %s158, %s159
      %p171 = scmp.eq.s32.totalorder %s23, 1
      %p172 = por %p170, %p171
      %p174 = scmp.ne.s32.totalorder %s159, %s173
      %p175 = scmp.eq.s32.totalorder %s23, 0
      %p176 = por %p174, %p175
      %s178 = sadd.s32 %s177, 1
      %p181 = scmp.eq.s32.totalorder %s17, 1
      %p182 = scmp.ne.s32.totalorder %s177, %s179
      %p183 = scmp.eq.s32.totalorder %s17, 0
      %p184 = por %p182, %p183
      %p185 = scmp.ne.s32.totalorder %s177, %s179
      %p186 = scmp.eq.s32.totalorder %s22, 1
      %p187 = por %p185, %p186
      %p188 = scmp.ne.s32.totalorder %s179, %s180
      %p189 = scmp.eq.s32.totalorder %s22, 0
      %p190 = por %p188, %p189
      %p191 = scmp.ne.s32.totalorder %s179, %s180
      %p192 = scmp.eq.s32.totalorder %s23, 1
      %p193 = por %p191, %p192
      %p195 = scmp.ne.s32.totalorder %s180, %s194
      %p196 = scmp.eq.s32.totalorder %s23, 0
      %p197 = por %p195, %p196
      %s198 = ssub.s32 %s17, %s24
      %p199 = scmp.eq.s32.totalorder %s198, 0
      %s201 = sadd.s32 %s200, 1
      %s202 = scalar_select %p199, %s200, %s201
      %p205 = pneg %p199
      %p206 = scmp.eq.s32.totalorder %s17, 1
      %p207 = por %p205, %p206
      %p208 = scmp.ne.s32.totalorder %s200, %s203
      %p209 = scmp.eq.s32.totalorder %s17, 0
      %p210 = por %p208, %p209
      %p211 = scmp.ne.s32.totalorder %s200, %s203
      %p212 = scmp.eq.s32.totalorder %s22, 1
      %p213 = por %p211, %p212
      %p214 = scmp.ne.s32.totalorder %s203, %s204
      %p215 = scmp.eq.s32.totalorder %s22, 0
      %p216 = por %p214, %p215
      %p217 = scmp.ne.s32.totalorder %s203, %s204
      %p218 = scmp.eq.s32.totalorder %s23, 1
      %p219 = por %p217, %p218
      %p221 = scmp.ne.s32.totalorder %s204, %s220
      %p222 = scmp.eq.s32.totalorder %s23, 0
      %p223 = por %p221, %p222
      %p224 = scmp.le.s32.totalorder 1, %s17
      %p225 = scmp.lt.s32.totalorder %s17, 3
      %p226 = pnand %p224, %p225
      %p227 = pneg %p226
      // Predicated region
      $region9: #{short_conv_block.1} parent=5 // pred_check
        _
      $region10: #{short_conv_block.1} parent=5 // pred_check_branch
        %229 = sbr.rel (%p226) target = $region12
      $region11: #{short_conv_block.1} parent=5 // pred_region
        %s230 = ssub.s32 %s17, 1
        // Predicated region
        $region13: #{short_conv_block.1} parent=11 // pred_check
          %p231 = pneg %p64
        $region14: #{short_conv_block.1} parent=11 // pred_check_branch
          %233 = sbr.rel (%p231) target = $region16
        $region15: #{short_conv_block.1} parent=11 // pred_region
          _
        $region16: #{short_conv_block.1} parent=11 // pred_fallthru
          _
        // Predicated region
        $region17: #{short_conv_block.1} parent=11 // pred_check
          %p234 = pneg %p85
        $region18: #{short_conv_block.1} parent=11 // pred_check_branch
          %236 = sbr.rel (%p234) target = $region20
        $region19: #{short_conv_block.1} parent=11 // pred_region
          _
        $region20: #{short_conv_block.1} parent=11 // pred_fallthru
          _
        // Predicated region
        $region21: #{short_conv_block.1} parent=11 // pred_check
          %p237 = pneg %p106
        $region22: #{short_conv_block.1} parent=11 // pred_check_branch
          %239 = sbr.rel (%p237) target = $region24
        $region23: #{short_conv_block.1} parent=11 // pred_region
          _
        $region24: #{short_conv_block.1} parent=11 // pred_fallthru
          _
        // Predicated region
        $region25: #{short_conv_block.1} parent=11 // pred_check
          %p240 = pneg %p127
        $region26: #{short_conv_block.1} parent=11 // pred_check_branch
          %242 = sbr.rel (%p240) target = $region28
        $region27: #{short_conv_block.1} parent=11 // pred_region
          _
        $region28: #{short_conv_block.1} parent=11 // pred_fallthru
          _
        // Predicated region
        $region29: #{short_conv_block.1} parent=11 // pred_check
          %p243 = pneg %p148
        $region30: #{short_conv_block.1} parent=11 // pred_check_branch
          %245 = sbr.rel (%p243) target = $region32
        $region31: #{short_conv_block.1} parent=11 // pred_region
          _
        $region32: #{short_conv_block.1} parent=11 // pred_fallthru
          _
        // Predicated region
        $region33: #{short_conv_block.1} parent=11 // pred_check
          %p246 = pneg %p169
        $region34: #{short_conv_block.1} parent=11 // pred_check_branch
          %248 = sbr.rel (%p246) target = $region36
        $region35: #{short_conv_block.1} parent=11 // pred_region
          _
        $region36: #{short_conv_block.1} parent=11 // pred_fallthru
          _
        // Predicated region
        $region37: #{short_conv_block.1} parent=11 // pred_check
          %p249 = pneg %p190
        $region38: #{short_conv_block.1} parent=11 // pred_check_branch
          %251 = sbr.rel (%p249) target = $region40
        $region39: #{short_conv_block.1} parent=11 // pred_region
          _
        $region40: #{short_conv_block.1} parent=11 // pred_fallthru
          _
      $region12: #{short_conv_block.1} parent=5 // pred_fallthru
        _
      %p252 = scmp.lt.s32.totalorder %s17, 2
      // Predicated region
      $region41: #{short_conv_block.1} parent=5 // pred_check
        %p253 = pneg %p252
      $region42: #{short_conv_block.1} parent=5 // pred_check_branch
        %255 = sbr.rel (%p253) target = $region44
      $region43: #{short_conv_block.1} parent=5 // pred_region
        // Predicated region
        $region45: #{short_conv_block.1} parent=43 // pred_check
          %p256 = pneg %p37
        $region46: #{short_conv_block.1} parent=43 // pred_check_branch
          %258 = sbr.rel (%p256) target = $region48
        $region47: #{short_conv_block.1} parent=43 // pred_region
          %p259 = scmp.lt.s32.totalorder %s17, 1
          %s260 = scalar_select %p259, %s17, 1
          %s261 = smul.addr %s260, 2
          %s262 = smul.addr %s261, 8
          %s263 = scalar_lea.vmem %s0, %s262
        $region48: #{short_conv_block.1} parent=43 // pred_fallthru
          _
      $region44: #{short_conv_block.1} parent=5 // pred_fallthru
        _
      %p264 = scmp.le.s32.totalorder 1, %s17
      %p265 = scmp.lt.s32.totalorder %s17, 3
      %p266 = pnand %p264, %p265
      %p267 = pneg %p266
      // Predicated region
      $region49: #{short_conv_block.1} parent=5 // pred_check
        _
      $region50: #{short_conv_block.1} parent=5 // pred_check_branch
        %269 = sbr.rel (%p266) target = $region52
      $region51: #{short_conv_block.1} parent=5 // pred_region
        %s270 = ssub.s32 %s17, 1
        %p271 = scmp.lt.s32.totalorder %s22, 1
        %s272 = scalar_select %p271, %s22, 1
        %s273 = smul.addr %s272, 2
        %s274 = smul.addr %s273, 8
        %s275 = scalar_lea.vmem %s0, %s274
        %p276 = pneg %p43
        %p277 = pneg %p40
        %p278 = pneg %p64
        %p279 = pneg %p61
        %p280 = pneg %p85
        %p281 = pneg %p82
        %p282 = pneg %p106
        %p283 = pneg %p103
        %p284 = pneg %p127
        %p285 = pneg %p124
        %p286 = pneg %p148
        %p287 = pneg %p145
        %p288 = pneg %p169
        %p289 = pneg %p166
        %p290 = pneg %p190
        %p291 = pneg %p187
        %p292 = pneg %p216
        %p293 = pneg %p213
        %s294 = sand.u32 %s203, 1
        %s295 = scalar_lea.sflag [#allocation5], %s294
        %s296 = sand.u32 %s203, 1
        %s297 = smul.addr %s296, 16
        %s298 = scalar_lea.vmem [#allocation4], %s297
        %p299 = scmp.lt.s32.totalorder %s22, 1
        %s300 = scalar_select %p299, %s22, 1
        %s301 = smul.addr %s300, 2
        %s302 = smul.addr %s301, 8
        %s303 = scalar_lea.vmem %s0, %s302
        %v305 = vld [vmem:[%s303] sm:$0xff]
        %v306 = vld [vmem:[%s303 + $0x8] sm:$0xff]
        %v307 = vpack.c.bf16 %v306, %v305
        %v308 = vld [vmem:[%s1] sm:$0xf]
        %v309 = vld [vmem:[%s1 + $0x4] sm:$0xf]
        %v310 = vld [vmem:[%s1 + $0x8] sm:$0xf]
        %v311 = vld [vmem:[%s1 + $0xc] sm:$0xf]
        %v312 = vld [vmem:[%s1 + $0x10] sm:$0xf]
        %v313 = vld [vmem:[%s1 + $0x14] sm:$0xf]
        %v314 = vld [vmem:[%s1 + $0x18] sm:$0xf]
        %v315 = vld [vmem:[%s1 + $0x1c] sm:$0xf]
        %v316 = vld [vmem:[%s2] sm:$0x1]
        %v318 = vperm.slane %v316, 0
        %v328 = vunpack.c.l.b16 %v308
        %v329 = vunpack.c.l.b16 %v309
        %v330 = vunpack.c.l.b16 %v310
        %v331 = vunpack.c.l.b16 %v311
        %v332 = vunpack.c.l.b16 %v312
        %v333 = vunpack.c.l.b16 %v313
        %v334 = vunpack.c.l.b16 %v314
        %v335 = vunpack.c.l.b16 %v315
        %v336 = vpack.c.b16 %v329, %v328
        %v337 = vpack.c.b16 %v331, %v330
        %v338 = vpack.c.b16 %v333, %v332
        %v339 = vpack.c.b16 %v335, %v334
        %vm344 = vcmask 523264
        %v346 = vsel %vm344, %v307, 0
        %348 = vmatpush.bf16.msra.mxu0 0
        %349 = vmatpush.bf16.msra.mxu0 0
        %350 = vmatpush.bf16.msra.mxu0 0
        %351 = vmatpush.bf16.msra.mxu0 0
        %352 = vmatpush.bf16.msra.mxu0 %v339
        %353 = vmatpush.bf16.msra.mxu0 %v338
        %354 = vmatpush.bf16.msra.mxu0 %v337
        %355 = vmatpush.bf16.msra.mxu0 %v336
        %356 = vmatmul.bf16.gmra.mxu0 %v346
        %v357 = vpop.f32.mrf.mxu0
        %v358 = vadd.f32 %v318, %v357
        %v359 = vpop.f32.mrf.mxu0
        %v360 = vadd.f32 %v318, %v359
        %361 = vdwg.mxu0
        %vm362 = vcmp.ge.f32.partialorder %v358, 0.0
        %vm363 = vcmp.ge.f32.partialorder %v360, 0.0
        %v364 = vld [vmem:[%s3] sm:$0x1]
        %v366 = vperm.slane %v364, 0
        %v368 = vmul.f32 %v366, %v358
        %v369 = vmul.f32 %v366, %v360
        %v370 = vsel %vm362, %v358, %v368
        %v371 = vsel %vm363, %v360, %v369
        %v372 = vpack.c.bf16 %v370, %v370
        %v373 = vpack.c.bf16 %v371, %v371
        %vm374 = vcmask 125952
        %375 = vst.msk [vmem:[#allocation2] sm:$0xf] %vm374, 0
        %376 = vst.msk [vmem:[#allocation2 + $0xc] sm:$0xf] %vm374, 0
        %377 = vst.msk [vmem:[#allocation2 + $0x4] sm:$0xf] %vm374, %v372
        %378 = vst.msk [vmem:[#allocation2 + $0x8] sm:$0xf] %vm374, %v373
        %v379 = vld [vmem:[#allocation2] sm:$0xf]
        %v380 = vld [vmem:[#allocation2 + $0x4] sm:$0xf]
        %381 = vst.msk [vmem:[#allocation3] sm:$0xf] %vm374, %v379
        %382 = vst.msk [vmem:[#allocation3 + $0x8] sm:$0xf] %vm374, %v380
        %v383 = vld [vmem:[#allocation2] sm:$0xc]
        %v384 = vld [vmem:[#allocation2 + $0x4] sm:$0xf]
        %v385 = vld [vmem:[#allocation2 + $0x8] sm:$0x3]
        %vm389 = vcmask 1041408
        %vm390 = vcmask 1045508
        %vm391 = vmor %vm389, %vm390
        %v392 = vrot.slane %v383, 6
        %v393 = vrot.slane %v392, 4
        %v394 = vrot.slane %v384, 6
        %v395 = vsel %vm391, %v393, %v394
        %v396 = vrot.slane %v394, 4
        %v397 = vrot.slane %v385, 6
        %v398 = vsel %vm391, %v396, %v397
        %399 = vrot.lane.b32.xlu0 %v395, 16
        %v400 = vpop.permute.xlu0 %399
        %401 = vrot.lane.b32.xlu0 %v398, 16
        %v402 = vpop.permute.xlu0 %401
        %vm405 = vcmask 257152
        %406 = vst.msk [vmem:[#allocation3] sm:$0xf] %vm405, %v400
        %407 = vst.msk [vmem:[#allocation3 + $0x8] sm:$0xf] %vm405, %v402
        %v408 = vld [vmem:[#allocation2] sm:$0x8]
        %v409 = vld [vmem:[#allocation2 + $0x4] sm:$0xf]
        %v410 = vld [vmem:[#allocation2 + $0x8] sm:$0x7]
        %vm414 = vcmask 1040384
        %vm415 = vcmask 1044484
        %vm416 = vmor %vm414, %vm415
        %v417 = vrot.slane %v408, 7
        %v418 = vrot.slane %v417, 4
        %v419 = vrot.slane %v409, 7
        %v420 = vsel %vm416, %v418, %v419
        %v421 = vrot.slane %v419, 4
        %v422 = vrot.slane %v410, 7
        %v423 = vsel %vm416, %v421, %v422
        %424 = vrot.lane.b32.xlu0 %v420, 32
        %v425 = vpop.permute.xlu0 %424
        %426 = vrot.lane.b32.xlu0 %v423, 32
        %v427 = vpop.permute.xlu0 %426
        %vm430 = vcmask 388352
        %431 = vst.msk [vmem:[#allocation3] sm:$0xf] %vm430, %v425
        %432 = vst.msk [vmem:[#allocation3 + $0x8] sm:$0xf] %vm430, %v427
        %v433 = vld [vmem:[#allocation2] sm:$0x8]
        %v434 = vld [vmem:[#allocation2 + $0x4] sm:$0xf]
        %v435 = vld [vmem:[#allocation2 + $0x8] sm:$0xf]
        %vm436 = vsmask.f32 256
        %vm437 = vsmask.f32 4368
        %vm438 = vmor %vm436, %vm437
        %v440 = vshrl.u32 %v433, 16
        %v442 = vrot.slane %v440, 7
        %v443 = vrot.slane %v442, 4
        %v445 = vshrl.u32 %v434, 16
        %v447 = vrot.slane %v445, 7
        %v448 = vshll.u32 %v434, 16
        %v450 = vor.u32 %v447, %v448
        %v451 = vsel %vm438, %v443, %v450
        %v452 = vrot.slane %v447, 4
        %v454 = vshrl.u32 %v435, 16
        %v456 = vrot.slane %v454, 7
        %v457 = vshll.u32 %v435, 16
        %v459 = vor.u32 %v456, %v457
        %v460 = vsel %vm438, %v452, %v459
        %461 = vrot.lane.b32.xlu0 %v451, 48
        %v462 = vpop.permute.xlu0 %461
        %463 = vrot.lane.b32.xlu0 %v460, 48
        %v464 = vpop.permute.xlu0 %463
        %vm467 = vcmask 519552
        %468 = vst.msk [vmem:[#allocation3] sm:$0xf] %vm467, %v462
        %469 = vst.msk [vmem:[#allocation3 + $0x8] sm:$0xf] %vm467, %v464
        %v470 = vld [vmem:[#allocation2 + $0x4] sm:$0xf]
        %v471 = vld [vmem:[#allocation2 + $0x8] sm:$0xf]
        %474 = vrot.lane.b32.xlu0 %v470, 64
        %v475 = vpop.permute.xlu0 %474
        %476 = vrot.lane.b32.xlu0 %v471, 64
        %v477 = vpop.permute.xlu0 %476
        %vm480 = vcmask 650752
        %481 = vst.msk [vmem:[#allocation3] sm:$0xf] %vm480, %v475
        %482 = vst.msk [vmem:[#allocation3 + $0x8] sm:$0xf] %vm480, %v477
        %v483 = vld [vmem:[#allocation2 + $0x4] sm:$0xf]
        %v484 = vld [vmem:[#allocation2 + $0x8] sm:$0xf]
        %v485 = vld [vmem:[#allocation2 + $0xc] sm:$0x1]
        %vm486 = vsmask.f32 3328
        %vm487 = vsmask.f32 7440
        %vm488 = vmor %vm486, %vm487
        %v490 = vshrl.u32 %v483, 16
        %v492 = vrot.slane %v490, 4
        %v493 = vshll.u32 %v483, 16
        %v495 = vrot.slane %v493, 5
        %v496 = vor.u32 %v492, %v495
        %v497 = vrot.slane %v496, 4
        %v499 = vshll.u32 %v484, 16
        %v501 = vrot.slane %v499, 5
        %v502 = vsel %vm488, %v497, %v501
        %v503 = vshrl.u32 %v484, 16
        %v505 = vrot.slane %v503, 4
        %v506 = vor.u32 %v505, %v501
        %v507 = vrot.slane %v506, 4
        %v509 = vshll.u32 %v485, 16
        %v511 = vrot.slane %v509, 5
        %v512 = vsel %vm488, %v507, %v511
        %513 = vrot.lane.b32.xlu0 %v502, 80
        %v514 = vpop.permute.xlu0 %513
        %515 = vrot.lane.b32.xlu0 %v512, 80
        %v516 = vpop.permute.xlu0 %515
        %vm519 = vcmask 781952
        %520 = vst.msk [vmem:[#allocation3] sm:$0xf] %vm519, %v514
        %521 = vst.msk [vmem:[#allocation3 + $0x8] sm:$0xf] %vm519, %v516
        %v522 = vld [vmem:[#allocation2 + $0x4] sm:$0xe]
        %v523 = vld [vmem:[#allocation2 + $0x8] sm:$0xf]
        %v524 = vld [vmem:[#allocation2 + $0xc] sm:$0x1]
        %vm528 = vcmask 1042432
        %vm529 = vcmask 1046532
        %vm530 = vmor %vm528, %vm529
        %v531 = vrot.slane %v522, 5
        %v532 = vrot.slane %v531, 4
        %v533 = vrot.slane %v523, 5
        %v534 = vsel %vm530, %v532, %v533
        %v535 = vrot.slane %v533, 4
        %v536 = vrot.slane %v524, 5
        %v537 = vsel %vm530, %v535, %v536
        %538 = vrot.lane.b32.xlu0 %v534, 96
        %v539 = vpop.permute.xlu0 %538
        %540 = vrot.lane.b32.xlu0 %v537, 96
        %v541 = vpop.permute.xlu0 %540
        %vm544 = vcmask 913152
        %545 = vst.msk [vmem:[#allocation3] sm:$0xf] %vm544, %v539
        %546 = vst.msk [vmem:[#allocation3 + $0x8] sm:$0xf] %vm544, %v541
        %v547 = vld [vmem:[#allocation2 + $0x4] sm:$0xc]
        %v548 = vld [vmem:[#allocation2 + $0x8] sm:$0xf]
        %v549 = vld [vmem:[#allocation2 + $0xc] sm:$0x3]
        %v553 = vrot.slane %v547, 6
        %v554 = vrot.slane %v553, 4
        %v555 = vrot.slane %v548, 6
        %v556 = vsel %vm391, %v554, %v555
        %v557 = vrot.slane %v555, 4
        %v558 = vrot.slane %v549, 6
        %v559 = vsel %vm391, %v557, %v558
        %560 = vrot.lane.b32.xlu0 %v556, 112
        %v561 = vpop.permute.xlu0 %560
        %562 = vrot.lane.b32.xlu0 %v559, 112
        %v563 = vpop.permute.xlu0 %562
        %vm566 = vcmask 1044352
        %567 = vst.msk [vmem:[#allocation3] sm:$0xf] %vm566, %v561
        %568 = vst.msk [vmem:[#allocation3 + $0x8] sm:$0xf] %vm566, %v563
        %v569 = vld [vmem:[#allocation2 + $0x8] sm:$0xf]
        %v570 = vld [vmem:[#allocation2 + $0xc] sm:$0xf]
        %571 = vst.msk [vmem:[#allocation3 + $0x4] sm:$0xf] %vm374, %v569
        %572 = vst.msk [vmem:[#allocation3 + $0xc] sm:$0xf] %vm374, %v570
        %v573 = vld [vmem:[#allocation3] sm:$0xff]
        %v574 = vld [vmem:[#allocation3 + $0x8] sm:$0xff]
        %v575 = vld [vmem:[%s4] sm:$0xf]
        %v576 = vld [vmem:[%s4 + $0x4] sm:$0xf]
        %v577 = vld [vmem:[%s4 + $0x8] sm:$0xf]
        %v578 = vld [vmem:[%s4 + $0xc] sm:$0xf]
        %v579 = vld [vmem:[%s4 + $0x10] sm:$0xf]
        %v580 = vld [vmem:[%s4 + $0x14] sm:$0xf]
        %v581 = vld [vmem:[%s4 + $0x18] sm:$0xf]
        %v582 = vld [vmem:[%s4 + $0x1c] sm:$0xf]
        %v583 = vld [vmem:[%s4 + $0x20] sm:$0xf]
        %v584 = vld [vmem:[%s4 + $0x24] sm:$0xf]
        %v585 = vld [vmem:[%s4 + $0x28] sm:$0xf]
        %v586 = vld [vmem:[%s4 + $0x2c] sm:$0xf]
        %v587 = vld [vmem:[%s4 + $0x30] sm:$0xf]
        %v588 = vld [vmem:[%s4 + $0x34] sm:$0xf]
        %v589 = vld [vmem:[%s4 + $0x38] sm:$0xf]
        %v590 = vld [vmem:[%s4 + $0x3c] sm:$0xf]
        %v591 = vld [vmem:[%s4 + $0x40] sm:$0xf]
        %v592 = vld [vmem:[%s4 + $0x44] sm:$0xf]
        %v595 = vunpack.c.l.b16 %v573
        %v596 = vunpack.c.h.b16 %v573
        %v597 = vunpack.c.l.b16 %v574
        %v598 = vunpack.c.h.b16 %v574
        %v599 = vpack.c.b16 %v597, %v595
        %v600 = vpack.c.b16 %v598, %v596
        %v620 = vunpack.c.l.b16 %v575
        %v621 = vunpack.c.l.b16 %v576
        %v622 = vunpack.c.l.b16 %v577
        %v623 = vunpack.c.l.b16 %v578
        %v624 = vunpack.c.l.b16 %v579
        %v625 = vunpack.c.l.b16 %v580
        %v626 = vunpack.c.l.b16 %v581
        %v627 = vunpack.c.l.b16 %v582
        %v628 = vunpack.c.l.b16 %v583
        %v629 = vunpack.c.l.b16 %v584
        %v630 = vunpack.c.l.b16 %v585
        %v631 = vunpack.c.l.b16 %v586
        %v632 = vunpack.c.l.b16 %v587
        %v633 = vunpack.c.l.b16 %v588
        %v634 = vunpack.c.l.b16 %v589
        %v635 = vunpack.c.l.b16 %v590
        %v636 = vunpack.c.l.b16 %v591
        %v637 = vunpack.c.l.b16 %v592
        %v638 = vpack.c.b16 %v621, %v620
        %v639 = vpack.c.b16 %v623, %v622
        %v640 = vpack.c.b16 %v625, %v624
        %v641 = vpack.c.b16 %v627, %v626
        %v642 = vpack.c.b16 %v629, %v628
        %v643 = vpack.c.b16 %v631, %v630
        %v644 = vpack.c.b16 %v633, %v632
        %v645 = vpack.c.b16 %v635, %v634
        %v646 = vpack.c.b16 %v637, %v636
        %vm656 = vcmask 130048
        %v658 = vsel %vm656, %v600, 0
        %660 = vmatpush.bf16.msra.mxu0 %v645
        %661 = vmatpush.bf16.msra.mxu0 %v644
        %662 = vmatpush.bf16.msra.mxu0 %v643
        %663 = vmatpush.bf16.msra.mxu0 %v642
        %664 = vmatpush.bf16.msra.mxu0 %v641
        %665 = vmatpush.bf16.msra.mxu0 %v640
        %666 = vmatpush.bf16.msra.mxu0 %v639
        %667 = vmatpush.bf16.msra.mxu0 %v638
        %668 = vmatmul.bf16.gmra.mxu0 %v599
        %v669 = vpop.f32.mrf.mxu0
        %v670 = vadd.f32 %v305, %v669
        %v671 = vpop.f32.mrf.mxu0
        %v672 = vadd.f32 %v306, %v671
        %673 = vdwg.mxu0
        %674 = vmatpush.bf16.msra.mxu0 0
        %675 = vmatpush.bf16.msra.mxu0 0
        %676 = vmatpush.bf16.msra.mxu0 0
        %677 = vmatpush.bf16.msra.mxu0 0
        %678 = vmatpush.bf16.msra.mxu0 0
        %679 = vmatpush.bf16.msra.mxu0 0
        %680 = vmatpush.bf16.msra.mxu0 0
        %681 = vmatpush.bf16.msra.mxu0 %v646
        %682 = vmatmul.bf16.gmra.mxu0 %v658
        %v683 = vpop.f32.mrf.mxu0
        %v684 = vadd.f32 %v670, %v683
        %v685 = vpop.f32.mrf.mxu0
        %v686 = vadd.f32 %v672, %v685
        %687 = vdwg.mxu0
        %v688 = vld [vmem:[%s5] sm:$0x1]
        %v690 = vperm.slane %v688, 0
        %v692 = vmul.f32 %v684, %v690
        %v693 = vmul.f32 %v686, %v690
        %v694 = vld [vmem:[%s6] sm:$0x1]
        %v696 = vperm.slane %v694, 0
        %v698 = vadd.f32 %v692, %v696
        %v699 = vadd.f32 %v693, %v696
        %vm700 = vcmp.ge.f32.partialorder %v698, 0.0
        %vm701 = vcmp.ge.f32.partialorder %v699, 0.0
        %v702 = vld [vmem:[%s7] sm:$0x1]
        %v704 = vperm.slane %v702, 0
        %v706 = vmul.f32 %v704, %v698
        %v707 = vmul.f32 %v704, %v699
        %v708 = vsel %vm700, %v698, %v706
        %v709 = vsel %vm701, %v699, %v707
        %710 = vst.msk [vmem:[%s298] sm:$0xff] %vm344, %v708
        %711 = vst.msk [vmem:[%s298 + $0x8] sm:$0xff] %vm344, %v709
        %s712 = sand.u32 %s203, 1
        %s713 = scalar_lea.sflag [#allocation5], %s712
        %s714 = sand.u32 %s203, 1
        %s715 = smul.addr %s714, 16
        %s716 = scalar_lea.vmem [#allocation4], %s715
        // Predicated region
        $region53: #{short_conv_block.1} parent=51 // pred_check
          %p717 = pneg %p213
        $region54: #{short_conv_block.1} parent=51 // pred_check_branch
          %719 = sbr.rel (%p717) target = $region56
        $region55: #{short_conv_block.1} parent=51 // pred_region
          %721 = vsyncadd %s713, 0
          %s722 = smul.addr %s22, 2
          %s723 = smul.addr %s722, 8
          %s724 = scalar_lea.hbm %s8, %s723
          %s725 = sshll.u32 %s716, 4
          %s726 = int_to_ptr.vmem [resolvable:$true] %s725
          %s727 = sshll.u32 %s724, 4
          %s728 = int_to_ptr.hbm [resolvable:$true] %s727
          %733 = dma.vmem_to_hbm [thread:$0]  %s726, 256, %s728, %s713, 128, 128, 8
        $region56: #{short_conv_block.1} parent=51 // pred_fallthru
          _
      $region52: #{short_conv_block.1} parent=5 // pred_fallthru
        _
      %p734 = scmp.le.s32.totalorder 2, %s17
      // Predicated region
      $region57: #{short_conv_block.1} parent=5 // pred_check
        %p735 = pneg %p734
      $region58: #{short_conv_block.1} parent=5 // pred_check_branch
        %737 = sbr.rel (%p735) target = $region60
      $region59: #{short_conv_block.1} parent=5 // pred_region
        %s738 = ssub.s32 %s17, 2
        // Predicated region
        $region61: #{short_conv_block.1} parent=59 // pred_check
          %p739 = pneg %p219
        $region62: #{short_conv_block.1} parent=59 // pred_check_branch
          %741 = sbr.rel (%p739) target = $region64
        $region63: #{short_conv_block.1} parent=59 // pred_region
          %s742 = sand.u32 %s204, 1
          %s743 = scalar_lea.sflag [#allocation5], %s742
          %s744 = sand.u32 %s204, 1
          %s745 = smul.addr %s744, 16
          %s746 = scalar_lea.vmem [#allocation4], %s745
          %748 = dma.done %s743, 256
        $region64: #{short_conv_block.1} parent=59 // pred_fallthru
          _
      $region60: #{short_conv_block.1} parent=5 // pred_fallthru
        _
    $region6: #{short_conv_block.1} parent=1 // loop_footer
      %s21 = sadd.s32 1, %s17
    $region7: #{short_conv_block.1} parent=1 // loop_footer_branch
      %16 = sbr.rel target = $region3
    $region8: #{short_conv_block.1} parent=1 // loop_exit
      _
    %749 = vsyncpa [#allocation5], 1
    %s750 = scalar_lea.sflag [#allocation5], 1
    %751 = vsyncpa %s750, 1

</llo_original>
